<compile_context>
chip_gen: v6e
topology: v6e:2x2x1
jax: 0.10.0
libtpu: 0.0.40
codegen_flags: <defaults>
</compile_context>

<pallas_src>
import functools

import jax
import jax.numpy as jnp
from jax.experimental import pallas as pl
from jax.experimental.pallas import tpu as pltpu


_ACTIVATIONS = {
    "relu": lambda x: jnp.maximum(x, 0.0),
    "sigmoid": jax.nn.sigmoid,
    "tanh": jnp.tanh,
}


def _make_kernel(with_hidden: bool, activation: str):
    act = _ACTIVATIONS[activation]

    def kernel(x_ref, w1_ref, w2_ref, b2_ref, *out_refs):
        """
        x_ref  : (Bblk, W*D + 1)  fused per-head [time, emb...] blocks + ones column
        w1_ref : (W*D + 1, W*H)   block-diag input_layer weight, b1 folded as last row
        w2_ref : (W*H, O)         output_layer weight (transposed vs torch), head-major rows
        b2_ref : (1, O)           output_layer bias
        out_refs: (out,) or (out, hid_flat)   out: (Bblk, O), hid_flat: (Bblk, W*H)
        """
        out_ref = out_refs[0]

        # First layer of ALL heads + bias in a single MXU matmul (K = W*D + 1,
        # far below the 128/256 MXU depth).  The activation is the only VPU
        # pass over the (Bblk, W*H) hidden slab.
        h = jnp.dot(x_ref[...], w1_ref[...], preferred_element_type=jnp.float32)
        h = act(h)

        if with_hidden:
            # Single full-tile, lane-dense (W*H is a multiple of 128) store.
            out_refs[1][...] = h.astype(out_refs[1].dtype)

        # Output layer: hidden is already flattened head-major -> one K = W*H
        # contraction.  Dropout is identity in eval mode.  Cast only at the MXU
        # boundary; keep f32 accumulation / elementwise.
        out = jnp.dot(h.astype(w2_ref.dtype), w2_ref[...],
                      preferred_element_type=jnp.float32)
        out = out + b2_ref[...].astype(jnp.float32)
        out_ref[...] = out.astype(out_ref.dtype)

    return kernel


def prepare_multihead_mlp_params(params, input_window, compute_dtype=None):
    """One-time (per parameter set) expansion of the per-head input layer.

    params:
      w1: (D, H)    input_layer weight, transposed vs torch (D = 1 + token_dim)
      b1: (H,)      input_layer bias
      w2: (W*H, O)  output_layer weight, transposed vs torch.  Row index MUST be
                    head-major (row = w*H + h), exactly the order produced by
                    hidden_state.view(B, -1) in the torch module.
      b2: (O,)      output_layer bias
    """
    w1 = jnp.asarray(params["w1"])
    b1 = jnp.asarray(params["b1"])
    w2 = jnp.asarray(params["w2"])
    b2 = jnp.asarray(params["b2"])

    D, H = w1.shape
    W = input_window
    WD, WH = W * D, W * H
    O = w2.shape[-1]
    assert b1.shape == (H,)
    assert w2.shape == (WH, O), "w2 must be (input_window*hidden_dim, output_window), head-major rows"
    assert b2.shape == (O,)

    if compute_dtype is None:
        compute_dtype = w1.dtype

    # Block-diagonal expansion:
    #   w1_blk[u*D + d, w*H + h] = (u == w) * w1[d, h]
    # so (x_flat @ w1_blk)[b, w*H + h] = sum_d x[b, w, d] * w1[d, h]:
    # the hidden state of all heads comes out head-major & lane-dense.
    eye_w = jnp.eye(W, dtype=w1.dtype)
    w1_blk = (eye_w[:, None, :, None] * w1[None, :, None, :]).reshape(WD, WH)
    b1_row = jnp.tile(b1, W).reshape(1, WH)              # bias folded: input's last column is 1.0
    w1_big = jnp.concatenate([w1_blk, b1_row], axis=0)   # (W*D + 1, W*H)

    return {
        "w1_big": w1_big.astype(compute_dtype),
        "w2": w2.astype(compute_dtype),
        "b2": b2.reshape(1, O).astype(jnp.float32),
    }


def _choose_block_b(B):
    # Tiny batch: one block equal to the full dim (block dim == array dim is a
    # legal layout even when not a multiple of 8).
    if B < 16:
        return B
    # >= 2 grid steps so both v7x TensorCores get work under "parallel"; blocks
    # are multiples of 8 sublanes and capped at 1024 rows (per-step footprint
    # stays ~1-2 MiB, and step overhead is amortized on v5e/v6e).
    half = -(-B // 2)
    half = ((half + 7) // 8) * 8
    return min(half, 1024)


@functools.partial(jax.jit, static_argnames=("return_hidden_state", "activation"))
def multihead_mlp_forward(input_time, input_embedding, prepared,
                          return_hidden_state=False, activation="relu"):
    """Eval-mode forward of MultiHeadMLP (dropout = identity).

    input_time:      (B, W) or (B, W, 1)
    input_embedding: (B, W, T) or (B, T) [-> (B, 1, T)]
    prepared:        output of prepare_multihead_mlp_params
    """
    if input_time.ndim == 3:               # (B, W, 1) -> (B, W)
        input_time = input_time[..., 0]
    if input_embedding.ndim == 2:          # (B, T) -> (B, 1, T)
        input_embedding = input_embedding[:, None, :]

    B, W = input_time.shape
    T = input_embedding.shape[-1]
    D = 1 + T
    WD1 = W * D + 1
    WH = prepared["w1_big"].shape[-1]
    H = WH // W
    O = prepared["w2"].shape[-1]
    assert prepared["w1_big"].shape == (WD1, WH)

    out_dtype = input_embedding.dtype
    compute_dtype = prepared["w1_big"].dtype

    # Fused first-layer input: per-head [time, emb_0..emb_{T-1}] blocks, heads
    # concatenated head-major, plus a trailing ones column for the folded bias.
    # Both inputs are cast to ONE compute dtype (no silent precision mixing).
    x = jnp.concatenate(
        [input_time[..., None].astype(compute_dtype),
         input_embedding.astype(compute_dtype)], axis=-1)                 # (B, W, D)
    x_fused = jnp.concatenate(
        [x.reshape(B, W * D), jnp.ones((B, 1), compute_dtype)], axis=-1)  # (B, W*D + 1)

    block_b = _choose_block_b(B)
    grid = (pl.cdiv(B, block_b),)

    def row_spec(ncols):
        return pl.BlockSpec((block_b, ncols), lambda i: (i, 0))

    def const_spec(shape):
        # Constant block index -> DMA'd once, reused across grid steps.
        return pl.BlockSpec(shape, lambda i: (0, 0))

    in_specs = [
        row_spec(WD1),             # x_fused
        const_spec((WD1, WH)),     # w1_big
        const_spec((WH, O)),       # w2
        const_spec((1, O)),        # b2
    ]

    if return_hidden_state:
        out_shape = (jax.ShapeDtypeStruct((B, O), out_dtype),
                     jax.ShapeDtypeStruct((B, WH), out_dtype))
        out_specs = (row_spec(O), row_spec(WH))
    else:
        # Hidden never leaves the kernel -> no HBM writeback of (B, W*H).
        out_shape = jax.ShapeDtypeStruct((B, O), out_dtype)
        out_specs = row_spec(O)

    result = pl.pallas_call(
        _make_kernel(return_hidden_state, activation),
        out_shape=out_shape,
        grid=grid,
        in_specs=in_specs,
        out_specs=out_specs,
        compiler_params=pltpu.CompilerParams(
            dimension_semantics=("parallel",)),
    )(x_fused, prepared["w1_big"], prepared["w2"], prepared["b2"])

    if return_hidden_state:
        out, hid_flat = result
        return out, hid_flat.reshape(B, W, H)
    return result


def _reference_forward(input_time, input_embedding, params):
    """Pure-JAX reference (matches the PyTorch semantics, eval mode)."""
    w1, b1, w2, b2 = params["w1"], params["b1"], params["w2"], params["b2"]
    x = jnp.concatenate([input_time[..., None], input_embedding], axis=-1)
    h = jax.nn.relu(jnp.einsum("bwd,dh->bwh", x, w1) + b1)
    B = x.shape[0]
    out = h.reshape(B, -1) @ w2 + b2
    return out, h


if __name__ == "__main__":
    # cfg: input_window=8 heads, output_window=4, token_dim=3 (-> input_dim=4),
    #      hidden_dim=32, activation='relu', dropout (identity at eval)
    B, W, token_dim, H, O = 2, 8, 3, 32, 4
    D = 1 + token_dim

    key = jax.random.PRNGKey(0)
    k_t, k_e, k_w1, k_b1, k_w2, k_b2 = jax.random.split(key, 6)

    input_time = jax.random.normal(k_t, (B, W), dtype=jnp.float32)
    input_embedding = jax.random.normal(k_e, (B, W, token_dim), dtype=jnp.float32)

    params = {
        "w1": jax.random.uniform(k_w1, (D, H), jnp.float32, -1.0, 1.0) / jnp.sqrt(D),
        "b1": jax.random.uniform(k_b1, (H,), jnp.float32, -1.0, 1.0) / jnp.sqrt(D),
        "w2": jax.random.uniform(k_w2, (W * H, O), jnp.float32, -1.0, 1.0) / jnp.sqrt(W * H),
        "b2": jax.random.uniform(k_b2, (O,), jnp.float32, -1.0, 1.0) / jnp.sqrt(W * H),
    }

    # One-time weight expansion (cache this; reuse across all forward calls).
    prepared_f32 = prepare_multihead_mlp_params(params, input_window=W)

    # Variant 1: f32, with hidden state returned.
    out, hid = multihead_mlp_forward(input_time, input_embedding, prepared_f32,
                                     return_hidden_state=True)
    out = jax.block_until_ready(out)
    hid = jax.block_until_ready(hid)

    # Variant 2: f32, output only (hidden never written to HBM).
    out_only = jax.block_until_ready(
        multihead_mlp_forward(input_time, input_embedding, prepared_f32,
                              return_hidden_state=False))

    ref_out, ref_hid = _reference_forward(input_time, input_embedding, params)

    assert out.shape == (B, O)
    assert hid.shape == (B, W, H)
    assert out_only.shape == (B, O)
    assert jnp.allclose(out, ref_out, atol=1e-5, rtol=1e-5)
    assert jnp.allclose(hid, ref_hid, atol=1e-5, rtol=1e-5)
    assert jnp.allclose(out_only, ref_out, atol=1e-5, rtol=1e-5)

    # Variant 3: bf16 at the MXU boundary (f32 accumulation) — halves input DMA
    # bytes and (if requested) the hidden writeback.  Loose check vs f32 ref.
    prepared_bf16 = prepare_multihead_mlp_params(params, input_window=W,
                                                 compute_dtype=jnp.bfloat16)
    out_bf16 = jax.block_until_ready(
        multihead_mlp_forward(input_time.astype(jnp.bfloat16),
                              input_embedding.astype(jnp.bfloat16),
                              prepared_bf16, return_hidden_state=False))
    assert out_bf16.shape == (B, O) and out_bf16.dtype == jnp.bfloat16
    assert jnp.allclose(out_bf16.astype(jnp.float32), ref_out, atol=1e-1, rtol=1e-1)

    print("KERNEL_OK")
</pallas_src>

<mosaic_0001>
module attributes {stable_mosaic.version = 11 : i64} {
  func.func @kernel(%arg0: i32, %arg1: memref<2x33xf32, #tpu.memory_space<vmem>>, %arg2: memref<33x256xf32, #tpu.memory_space<vmem>>, %arg3: memref<256x4xf32, #tpu.memory_space<vmem>>, %arg4: memref<1x4xf32, #tpu.memory_space<vmem>>, %arg5: memref<2x4xf32, #tpu.memory_space<vmem>>, %arg6: memref<2x256xf32, #tpu.memory_space<vmem>>) attributes {dimension_semantics = [#tpu.dimension_semantics<parallel>], iteration_bounds = array<i64: 1>, scalar_prefetch = 0 : i64, scratch_operands = 0 : i64, tpu.core_type = #tpu.core_type<tc>, window_params = [{transform_indices = @transform_0, window_bounds = array<i64: 2, 33>}, {pipeline_mode = #tpu.pipeline_mode<synchronous>, transform_indices = @transform_1, window_bounds = array<i64: 33, 256>}, {pipeline_mode = #tpu.pipeline_mode<synchronous>, transform_indices = @transform_2, window_bounds = array<i64: 256, 4>}, {pipeline_mode = #tpu.pipeline_mode<synchronous>, transform_indices = @transform_3, window_bounds = array<i64: 1, 4>}, {transform_indices = @transform_4, window_bounds = array<i64: 2, 4>}, {transform_indices = @transform_5, window_bounds = array<i64: 2, 256>}]} {
    %c0 = arith.constant 0 : index
    %c0_0 = arith.constant 0 : index
    %0 = vector.load %arg1[%c0, %c0_0] : memref<2x33xf32, #tpu.memory_space<vmem>>, vector<2x33xf32>
    %c0_1 = arith.constant 0 : index
    %c0_2 = arith.constant 0 : index
    %1 = vector.load %arg2[%c0_1, %c0_2] : memref<33x256xf32, #tpu.memory_space<vmem>>, vector<33x256xf32>
    %cst = arith.constant dense<0.000000e+00> : vector<2x256xf32>
    %2 = tpu.matmul %0, %1, %cst {dimension_numbers = #tpu.dot_dimension_numbers<[1], [0], [0], [1], [0, 0, 1, 1], [], []>} : vector<2x33xf32>, vector<33x256xf32>, vector<2x256xf32> -> vector<2x256xf32>
    %cst_3 = arith.constant 0.000000e+00 : f32
    %3 = vector.broadcast %cst_3 : f32 to vector<2x256xf32>
    %4 = arith.maximumf %2, %3 : vector<2x256xf32>
    %c0_4 = arith.constant 0 : index
    %c0_5 = arith.constant 0 : index
    %5 = vector.load %arg6[%c0_4, %c0_5] : memref<2x256xf32, #tpu.memory_space<vmem>>, vector<2x256xf32>
    tpu.vector_store %arg6[%c0_4, %c0_5], %4 {strides = array<i32>} : memref<2x256xf32, #tpu.memory_space<vmem>>, vector<2x256xf32>,
    %c0_6 = arith.constant 0 : index
    %c0_7 = arith.constant 0 : index
    %6 = vector.load %arg3[%c0_6, %c0_7] : memref<256x4xf32, #tpu.memory_space<vmem>>, vector<256x4xf32>
    %cst_8 = arith.constant dense<0.000000e+00> : vector<2x4xf32>
    %7 = tpu.matmul %4, %6, %cst_8 {dimension_numbers = #tpu.dot_dimension_numbers<[1], [0], [0], [1], [0, 0, 1, 1], [], []>} : vector<2x256xf32>, vector<256x4xf32>, vector<2x4xf32> -> vector<2x4xf32>
    %c0_9 = arith.constant 0 : index
    %c0_10 = arith.constant 0 : index
    %8 = vector.load %arg4[%c0_9, %c0_10] : memref<1x4xf32, #tpu.memory_space<vmem>>, vector<1x4xf32>
    %9 = vector.broadcast %8 : vector<1x4xf32> to vector<2x4xf32>
    %10 = arith.addf %7, %9 : vector<2x4xf32>
    %c0_11 = arith.constant 0 : index
    %c0_12 = arith.constant 0 : index
    %11 = vector.load %arg5[%c0_11, %c0_12] : memref<2x4xf32, #tpu.memory_space<vmem>>, vector<2x4xf32>
    tpu.vector_store %arg5[%c0_11, %c0_12], %10 {strides = array<i32>} : memref<2x4xf32, #tpu.memory_space<vmem>>, vector<2x4xf32>,
    return
  }
  func.func @transform_0(%arg0: i32) -> (i32, i32) {
    %c0_i32 = arith.constant 0 : i32
    %c0_i32_0 = arith.constant 0 : i32
    return %arg0, %c0_i32 : i32, i32
  }
  func.func @transform_1(%arg0: i32) -> (i32, i32) {
    %c0_i32 = arith.constant 0 : i32
    %c0_i32_0 = arith.constant 0 : i32
    %c0_i32_1 = arith.constant 0 : i32
    return %c0_i32, %c0_i32_0 : i32, i32
  }
  func.func @transform_2(%arg0: i32) -> (i32, i32) {
    %c0_i32 = arith.constant 0 : i32
    %c0_i32_0 = arith.constant 0 : i32
    %c0_i32_1 = arith.constant 0 : i32
    return %c0_i32, %c0_i32_0 : i32, i32
  }
  func.func @transform_3(%arg0: i32) -> (i32, i32) {
    %c0_i32 = arith.constant 0 : i32
    %c0_i32_0 = arith.constant 0 : i32
    %c0_i32_1 = arith.constant 0 : i32
    return %c0_i32, %c0_i32_0 : i32, i32
  }
  func.func @transform_4(%arg0: i32) -> (i32, i32) {
    %c0_i32 = arith.constant 0 : i32
    %c0_i32_0 = arith.constant 0 : i32
    return %arg0, %c0_i32 : i32, i32
  }
  func.func @transform_5(%arg0: i32) -> (i32, i32) {
    %c0_i32 = arith.constant 0 : i32
    %c0_i32_0 = arith.constant 0 : i32
    return %arg0, %c0_i32 : i32, i32
  }
}

</mosaic_0001>

<llo_original>
// kernel: multihead_mlp_forward.1
$region0: #{multihead_mlp_forward.1}
  #allocation0 [shape = 'u32[]', space=smem, size = 0x4, offset = 0x4, fixed_abs, tag = 'smem constant byte address 0x4 - core index']
  #allocation1 [shape = 'u32[144,128]{1,0:T(1,128)}', space=vmem, size = 0x12000, scoped, tag = 'internal scratch']
  %s0 = inlined_call_operand.vmem [shape: f32[2,33], index: 0, kind: input, shape index: {}]
  %s1 = inlined_call_operand.vmem [shape: f32[33,256], index: 1, kind: input, shape index: {}]
  %s2 = inlined_call_operand.vmem [shape: f32[256,4], index: 2, kind: input, shape index: {}]
  %s3 = inlined_call_operand.vmem [shape: f32[1,4], index: 3, kind: input, shape index: {}]
  %s4 = inlined_call_operand.hbm [shape: f32[2,4], index: 4, kind: output, shape index: {0}]
  %s5 = inlined_call_operand.vmem [shape: f32[2,256], index: 5, kind: output, shape index: {1}]
  %6 = xla_tuple %s4, %s5
  %s7 = sld [smem:[#allocation0]]
  $region34: #{multihead_mlp_forward.1} parent=0
    _
  %s9 = ssub.s32 1, %s7
  %s10 = scalar_select 0, %s9, %s7
  $region1: #{multihead_mlp_forward.1} parent=0
    #allocation2 [shape = 'u8[1024]{0}', space=vmem, size = 0x400, scoped, tag = 'output window, operand 0, single buffered']
    #allocation3 [shape = 's32[1]{0}', space=sflag, size = 0x4, scoped, tag = 'scoped memory for multihead_mlp_forward.1']
    %11 = vsyncpa [#allocation3], 0
    // Predicated region
    $region2: #{multihead_mlp_forward.1} parent=1 // pred_check
      _
    $region3: #{multihead_mlp_forward.1} parent=1 // pred_check_branch
      %13 = sbr.rel (0) target = $region5
    $region4: #{multihead_mlp_forward.1} parent=1 // pred_region
      _
    $region5: #{multihead_mlp_forward.1} parent=1 // pred_fallthru
      _
    // Predicated region
    $region6: #{multihead_mlp_forward.1} parent=1 // pred_check
      _
    $region7: #{multihead_mlp_forward.1} parent=1 // pred_check_branch
      %15 = sbr.rel (0) target = $region9
    $region8: #{multihead_mlp_forward.1} parent=1 // pred_region
      _
    $region9: #{multihead_mlp_forward.1} parent=1 // pred_fallthru
      _
    // Predicated region
    $region10: #{multihead_mlp_forward.1} parent=1 // pred_check
      _
    $region11: #{multihead_mlp_forward.1} parent=1 // pred_check_branch
      %17 = sbr.rel (0) target = $region13
    $region12: #{multihead_mlp_forward.1} parent=1 // pred_region
      _
    $region13: #{multihead_mlp_forward.1} parent=1 // pred_fallthru
      _
    // Predicated region
    $region14: #{multihead_mlp_forward.1} parent=1 // pred_check
      _
    $region15: #{multihead_mlp_forward.1} parent=1 // pred_check_branch
      %19 = sbr.rel (0) target = $region17
    $region16: #{multihead_mlp_forward.1} parent=1 // pred_region
      _
    $region17: #{multihead_mlp_forward.1} parent=1 // pred_fallthru
      _
    %v20 = vld [vmem:[%s0] sm:$0x3]
    %v21 = vld [vmem:[%s1] sm:$0xff]
    %v22 = vld [vmem:[%s1 + $0x8] sm:$0xff]
    %v23 = vld [vmem:[%s1 + $0x10] sm:$0xff]
    %v24 = vld [vmem:[%s1 + $0x18] sm:$0xff]
    %v25 = vld [vmem:[%s1 + $0x20] sm:$0xff]
    %v26 = vld [vmem:[%s1 + $0x28] sm:$0xff]
    %v27 = vld [vmem:[%s1 + $0x30] sm:$0xff]
    %v28 = vld [vmem:[%s1 + $0x38] sm:$0xff]
    %v29 = vld [vmem:[%s1 + $0x40] sm:$0x1]
    %v30 = vld [vmem:[%s1 + $0x48] sm:$0x1]
    %vm31 = vcmask 269312
    %v33 = vsel %vm31, %v20, 0
    %vm35 = vcmask 1040384
    %v37 = vsel %vm35, %v29, 0
    %v40 = vsel %vm35, %v30, 0
    %42 = vmatprep.subr.mxu0 0.0
    %43 = vmatpush1.msra.mxu0 0.0
    %44 = vmatprep.subr.mxu0 0.0
    %45 = vmatpush1.msra.mxu0 0.0
    %46 = vmatprep.subr.mxu0 0.0
    %47 = vmatpush1.msra.mxu0 0.0
    %48 = vmatprep.subr.mxu0 0.0
    %49 = vmatpush1.msra.mxu0 0.0
    %50 = vmatprep.subr.mxu0 0.0
    %51 = vmatpush1.msra.mxu0 0.0
    %52 = vmatprep.subr.mxu0 0.0
    %53 = vmatpush1.msra.mxu0 0.0
    %54 = vmatprep.subr.mxu0 0.0
    %55 = vmatpush1.msra.mxu0 0.0
    %56 = vmatprep.subr.mxu0 0.0
    %57 = vmatpush1.msra.mxu0 0.0
    %58 = vmatprep.subr.mxu0 0.0
    %59 = vmatpush1.msra.mxu0 0.0
    %60 = vmatprep.subr.mxu0 0.0
    %61 = vmatpush1.msra.mxu0 0.0
    %62 = vmatprep.subr.mxu0 0.0
    %63 = vmatpush1.msra.mxu0 0.0
    %64 = vmatprep.subr.mxu0 %v40
    %65 = vmatpush1.msra.mxu0 %v37
    %66 = vmatprep.subr.mxu0 %v28
    %67 = vmatpush1.msra.mxu0 %v27
    %68 = vmatprep.subr.mxu0 %v26
    %69 = vmatpush1.msra.mxu0 %v25
    %70 = vmatprep.subr.mxu0 %v24
    %71 = vmatpush1.msra.mxu0 %v23
    %72 = vmatprep.subr.mxu0 %v22
    %73 = vmatpush1.msra.mxu0 %v21
    %74 = vmatprep.subr.mxu0 0.0
    %75 = vmatpush2.msra.mxu0 0.0
    %76 = vmatprep.subr.mxu0 0.0
    %77 = vmatpush2.msra.mxu0 0.0
    %78 = vmatprep.subr.mxu0 0.0
    %79 = vmatpush2.msra.mxu0 0.0
    %80 = vmatprep.subr.mxu0 0.0
    %81 = vmatpush2.msra.mxu0 0.0
    %82 = vmatprep.subr.mxu0 0.0
    %83 = vmatpush2.msra.mxu0 0.0
    %84 = vmatprep.subr.mxu0 0.0
    %85 = vmatpush2.msra.mxu0 0.0
    %86 = vmatprep.subr.mxu0 0.0
    %87 = vmatpush2.msra.mxu0 0.0
    %88 = vmatprep.subr.mxu0 0.0
    %89 = vmatpush2.msra.mxu0 0.0
    %90 = vmatprep.subr.mxu0 0.0
    %91 = vmatpush2.msra.mxu0 0.0
    %92 = vmatprep.subr.mxu0 0.0
    %93 = vmatpush2.msra.mxu0 0.0
    %94 = vmatprep.subr.mxu0 0.0
    %95 = vmatpush2.msra.mxu0 0.0
    %96 = vmatprep.subr.mxu0 0.0
    %97 = vmatpush2.msra.mxu0 0.0
    %98 = vmatprep.subr.mxu0 0.0
    %99 = vmatpush2.msra.mxu0 0.0
    %100 = vmatprep.subr.mxu0 0.0
    %101 = vmatpush2.msra.mxu0 0.0
    %102 = vmatprep.subr.mxu0 0.0
    %103 = vmatpush2.msra.mxu0 0.0
    %104 = vmatprep.subr.mxu0 0.0
    %105 = vmatpush2.msra.mxu0 0.0
    %106 = vmatprep.mubr.f32.mxu0 0.0
    %107 = vmatmul.mubr.f32.gmra.mxu0 %v33
    %v108 = vpop.f32.mrf.mxu0
    %v109 = vadd.f32 0.0, %v108
    %v110 = vpop.f32.mrf.mxu0
    %v111 = vadd.f32 0.0, %v110
    %112 = vdwg.mxu0
    %v113 = vmax.f32 %v109, 0.0
    %v114 = vmax.f32 %v111, 0.0
    %v117 = vcombine.low %v113, %v114
    %v119 = vunpack.c.l.s4 1983009808
    %v120 = vunpack.c.0.s8 %v119
    %v121 = vlaneseq
    %v122 = vshrl.u32 %v121, 7
    %v123 = vsub.s32 %v120, %v122
    %v124 = vrot.slane %v117, %v123
    %126 = vst [vmem:[%s5] sm:$0xf] %v124
    %v127 = vld [vmem:[%s2] sm:$0xff]
    %v128 = vld [vmem:[%s2 + $0x8] sm:$0xff]
    %v129 = vld [vmem:[%s2 + $0x10] sm:$0xff]
    %v130 = vld [vmem:[%s2 + $0x18] sm:$0xff]
    %v131 = vld [vmem:[%s2 + $0x20] sm:$0xff]
    %v132 = vld [vmem:[%s2 + $0x28] sm:$0xff]
    %v133 = vld [vmem:[%s2 + $0x30] sm:$0xff]
    %v134 = vld [vmem:[%s2 + $0x38] sm:$0xff]
    %v135 = vld [vmem:[%s2 + $0x40] sm:$0xff]
    %v136 = vld [vmem:[%s2 + $0x48] sm:$0xff]
    %v137 = vld [vmem:[%s2 + $0x50] sm:$0xff]
    %v138 = vld [vmem:[%s2 + $0x58] sm:$0xff]
    %v139 = vld [vmem:[%s2 + $0x60] sm:$0xff]
    %v140 = vld [vmem:[%s2 + $0x68] sm:$0xff]
    %v141 = vld [vmem:[%s2 + $0x70] sm:$0xff]
    %v142 = vld [vmem:[%s2 + $0x78] sm:$0xff]
    %v143 = vld [vmem:[%s2 + $0x80] sm:$0xff]
    %v144 = vld [vmem:[%s2 + $0x88] sm:$0xff]
    %v145 = vld [vmem:[%s2 + $0x90] sm:$0xff]
    %v146 = vld [vmem:[%s2 + $0x98] sm:$0xff]
    %v147 = vld [vmem:[%s2 + $0xa0] sm:$0xff]
    %v148 = vld [vmem:[%s2 + $0xa8] sm:$0xff]
    %v149 = vld [vmem:[%s2 + $0xb0] sm:$0xff]
    %v150 = vld [vmem:[%s2 + $0xb8] sm:$0xff]
    %v151 = vld [vmem:[%s2 + $0xc0] sm:$0xff]
    %v152 = vld [vmem:[%s2 + $0xc8] sm:$0xff]
    %v153 = vld [vmem:[%s2 + $0xd0] sm:$0xff]
    %v154 = vld [vmem:[%s2 + $0xd8] sm:$0xff]
    %v155 = vld [vmem:[%s2 + $0xe0] sm:$0xff]
    %v156 = vld [vmem:[%s2 + $0xe8] sm:$0xff]
    %v157 = vld [vmem:[%s2 + $0xf0] sm:$0xff]
    %v158 = vld [vmem:[%s2 + $0xf8] sm:$0xff]
    %v159 = vld [vmem:[%s3] sm:$0x1]
    %v161 = vlaneseq
    %v162 = vshrl.u32 %v161, 7
    %v163 = vsub.s32 0, %v162
    %v164 = vrot.slane %v159, %v163
    %166 = vmatprep.subr.mxu0 0.0
    %167 = vmatpush1.msra.mxu0 %v142
    %168 = vmatprep.subr.mxu0 0.0
    %169 = vmatpush1.msra.mxu0 %v141
    %170 = vmatprep.subr.mxu0 0.0
    %171 = vmatpush1.msra.mxu0 %v140
    %172 = vmatprep.subr.mxu0 0.0
    %173 = vmatpush1.msra.mxu0 %v139
    %174 = vmatprep.subr.mxu0 0.0
    %175 = vmatpush1.msra.mxu0 %v138
    %176 = vmatprep.subr.mxu0 0.0
    %177 = vmatpush1.msra.mxu0 %v137
    %178 = vmatprep.subr.mxu0 0.0
    %179 = vmatpush1.msra.mxu0 %v136
    %180 = vmatprep.subr.mxu0 0.0
    %181 = vmatpush1.msra.mxu0 %v135
    %182 = vmatprep.subr.mxu0 0.0
    %183 = vmatpush1.msra.mxu0 %v134
    %184 = vmatprep.subr.mxu0 0.0
    %185 = vmatpush1.msra.mxu0 %v133
    %186 = vmatprep.subr.mxu0 0.0
    %187 = vmatpush1.msra.mxu0 %v132
    %188 = vmatprep.subr.mxu0 0.0
    %189 = vmatpush1.msra.mxu0 %v131
    %190 = vmatprep.subr.mxu0 0.0
    %191 = vmatpush1.msra.mxu0 %v130
    %192 = vmatprep.subr.mxu0 0.0
    %193 = vmatpush1.msra.mxu0 %v129
    %194 = vmatprep.subr.mxu0 0.0
    %195 = vmatpush1.msra.mxu0 %v128
    %196 = vmatprep.subr.mxu0 0.0
    %197 = vmatpush1.msra.mxu0 %v127
    %198 = vmatprep.subr.mxu0 0.0
    %199 = vmatpush2.msra.mxu0 %v158
    %200 = vmatprep.subr.mxu0 0.0
    %201 = vmatpush2.msra.mxu0 %v157
    %202 = vmatprep.subr.mxu0 0.0
    %203 = vmatpush2.msra.mxu0 %v156
    %204 = vmatprep.subr.mxu0 0.0
    %205 = vmatpush2.msra.mxu0 %v155
    %206 = vmatprep.subr.mxu0 0.0
    %207 = vmatpush2.msra.mxu0 %v154
    %208 = vmatprep.subr.mxu0 0.0
    %209 = vmatpush2.msra.mxu0 %v153
    %210 = vmatprep.subr.mxu0 0.0
    %211 = vmatpush2.msra.mxu0 %v152
    %212 = vmatprep.subr.mxu0 0.0
    %213 = vmatpush2.msra.mxu0 %v151
    %214 = vmatprep.subr.mxu0 0.0
    %215 = vmatpush2.msra.mxu0 %v150
    %216 = vmatprep.subr.mxu0 0.0
    %217 = vmatpush2.msra.mxu0 %v149
    %218 = vmatprep.subr.mxu0 0.0
    %219 = vmatpush2.msra.mxu0 %v148
    %220 = vmatprep.subr.mxu0 0.0
    %221 = vmatpush2.msra.mxu0 %v147
    %222 = vmatprep.subr.mxu0 0.0
    %223 = vmatpush2.msra.mxu0 %v146
    %224 = vmatprep.subr.mxu0 0.0
    %225 = vmatpush2.msra.mxu0 %v145
    %226 = vmatprep.subr.mxu0 0.0
    %227 = vmatpush2.msra.mxu0 %v144
    %228 = vmatprep.subr.mxu0 0.0
    %229 = vmatpush2.msra.mxu0 %v143
    %230 = vmatprep.mubr.f32.mxu0 %v114
    %231 = vmatmul.mubr.f32.gmra.mxu0 %v113
    %v232 = vpop.f32.mrf.mxu0
    %v233 = vadd.f32 %v164, %v232
    %v234 = vpop.f32.mrf.mxu0
    %235 = vdwg.mxu0
    %vm236 = vcmask 25600
    %237 = vst.msk [vmem:[#allocation2] sm:$0x3] %vm236, %v233
    // Predicated region
    $region18: #{multihead_mlp_forward.1} parent=1 // pred_check
      _
    $region19: #{multihead_mlp_forward.1} parent=1 // pred_check_branch
      %239 = sbr.rel (0) target = $region21
    $region20: #{multihead_mlp_forward.1} parent=1 // pred_region
      %s241 = ssub.s32 32, 32
      %242 = vsyncadd [#allocation3], %s241
      %s244 = sshll.u32 [#allocation2], 4
      %s245 = int_to_ptr.vmem [resolvable:$true] %s244
      %247 = dma.vmem_to_hbm [thread:$0]  %s245, 32, %s4, [#allocation3]
    $region21: #{multihead_mlp_forward.1} parent=1 // pred_fallthru
      _
    // Predicated region
    $region22: #{multihead_mlp_forward.1} parent=1 // pred_check
      _
    $region23: #{multihead_mlp_forward.1} parent=1 // pred_check_branch
      %249 = sbr.rel (0) target = $region25
    $region24: #{multihead_mlp_forward.1} parent=1 // pred_region
      _
    $region25: #{multihead_mlp_forward.1} parent=1 // pred_fallthru
      _
    // Predicated region
    $region26: #{multihead_mlp_forward.1} parent=1 // pred_check
      _
    $region27: #{multihead_mlp_forward.1} parent=1 // pred_check_branch
      %251 = sbr.rel (0) target = $region29
    $region28: #{multihead_mlp_forward.1} parent=1 // pred_region
      %252 = dma.done [#allocation3], 32
    $region29: #{multihead_mlp_forward.1} parent=1 // pred_fallthru
      _
    // Predicated region
    $region30: #{multihead_mlp_forward.1} parent=1 // pred_check
      _
    $region31: #{multihead_mlp_forward.1} parent=1 // pred_check_branch
      %254 = sbr.rel (0) target = $region33
    $region32: #{multihead_mlp_forward.1} parent=1 // pred_region
      _
    $region33: #{multihead_mlp_forward.1} parent=1 // pred_fallthru
      _
    %255 = vsyncpa [#allocation3], 1

</llo_original>
